<compile_context>
chip_gen: v5e
topology: v5e:2x2
jax: 0.10.0
libtpu: 0.0.40
codegen_flags: <defaults>
</compile_context>

<pallas_src>
import functools

import jax
import jax.numpy as jnp
from jax.experimental import pallas as pl
from jax.experimental.pallas import tpu as pltpu


# ------------------------------ kernel ------------------------------------- #

def encoder_layer_kernel(x_ref, wqkv_ref, bqkv_ref, wo_ref, bo_ref,
                         w1_ref, b1_ref, w2_ref, b2_ref, o_ref,
                         *, batch, d_model, nhead):
    """Fused self-attention + FFN for the whole (tiny) problem.

    x_ref:    (S, B*E)        seq-first tokens, batch folded into lanes
    wqkv_ref: (H, E, 3*dh)    per-head packed [Wq*scale | Wk | Wv], transposed
    bqkv_ref: (H, 1, 3*dh)    per-head packed biases (q part pre-scaled)
    wo_ref:   (H, dh, E)      per-head out-projection (sum over heads == concat)
    bo_ref:   (1, E)
    w1_ref:   (E, F), b1_ref: (1, F), w2_ref: (F, E), b2_ref: (1, E)
    o_ref:    (S, B*E)
    """
    E = d_model
    H = nhead
    dh = E // H
    S = x_ref.shape[0]

    x = x_ref[...]            # (S, B*E), already f32 -- no redundant casts
    wqkv = wqkv_ref[...]
    bqkv = bqkv_ref[...]
    wo = wo_ref[...]
    bo = bo_ref[...]

    attn_parts = []
    for b in range(batch):                                   # static tiny loop
        xb = x[:, b * E:(b + 1) * E]                         # (S, E)
        xh = jnp.broadcast_to(xb[None, :, :], (H, S, E))     # heads on batch axis

        # Packed QKV projection: one batched matmul over heads.
        qkv = jax.lax.dot_general(
            xh, wqkv, (((2,), (1,)), ((0,), (0,))),
            preferred_element_type=jnp.float32) + bqkv       # (H, S, 3*dh)
        q = qkv[:, :, :dh]
        k = qkv[:, :, dh:2 * dh]
        v = qkv[:, :, 2 * dh:]

        # Logits: contract dh directly (no explicit k transpose).
        logits = jax.lax.dot_general(
            q, k, (((2,), (2,)), ((0,), (0,))),
            preferred_element_type=jnp.float32)              # (H, S, S)

        m = jnp.max(logits, axis=-1, keepdims=True)
        p = jnp.exp(logits - m)
        denom = jnp.sum(p, axis=-1, keepdims=True)
        p = p * pl.reciprocal(denom, approx=True)            # EUP, off the VPU path

        ctx = jax.lax.dot_general(
            p, v, (((2,), (1,)), ((0,), (0,))),
            preferred_element_type=jnp.float32)              # (H, S, dh)

        # Per-head out-projection, summed over heads (== concat @ Wo^T).
        proj = jax.lax.dot_general(
            ctx, wo, (((2,), (1,)), ((0,), (0,))),
            preferred_element_type=jnp.float32)              # (H, S, E)
        attn_parts.append(jnp.sum(proj, axis=0) + bo)        # (S, E)

    attn_all = jnp.concatenate(attn_parts, axis=0)           # (B*S, E)

    # Feedforward on the full token matrix, fused in the same kernel.
    h1 = jnp.dot(attn_all, w1_ref[...],
                 preferred_element_type=jnp.float32) + b1_ref[...]
    h1 = jnp.maximum(h1, 0.0)
    y = jnp.dot(h1, w2_ref[...],
                preferred_element_type=jnp.float32) + b2_ref[...]   # (B*S, E)

    for b in range(batch):
        o_ref[:, b * E:(b + 1) * E] = y[b * S:(b + 1) * S, :].astype(o_ref.dtype)


# ------------------------------ wrapper ------------------------------------ #

def custom_encoder_layer(x_sbe, params, *, nhead):
    """Forward pass matching CustomEncoderLayer.forward (src_mask=None).

    x_sbe: (S, B, E) seq-first, like nn.MultiheadAttention's default layout.
    """
    S, B, E = x_sbe.shape
    H = nhead
    dh = E // H
    F = params["w1_t"].shape[1]

    # Free reshape (contiguous dims) -- replaces the old HBM transpose passes.
    x_flat = x_sbe.reshape(S, B * E)

    kernel = functools.partial(encoder_layer_kernel,
                               batch=B, d_model=E, nhead=H)

    def full(shape):
        nd = len(shape)
        return pl.BlockSpec(shape, lambda i, _nd=nd: (0,) * _nd)

    out_flat = pl.pallas_call(
        kernel,
        out_shape=jax.ShapeDtypeStruct((S, B * E), x_sbe.dtype),
        grid=(1,),
        in_specs=[
            full((S, B * E)),          # x
            full((H, E, 3 * dh)),      # wqkv_h
            full((H, 1, 3 * dh)),      # bqkv_h
            full((H, dh, E)),          # wo_h
            full((1, E)),              # bo
            full((E, F)),              # w1_t
            full((1, F)),              # b1
            full((F, E)),              # w2_t
            full((1, E)),              # b2
        ],
        out_specs=full((S, B * E)),
        compiler_params=pltpu.CompilerParams(
            dimension_semantics=("arbitrary",)),
    )(x_flat, params["wqkv_h"], params["bqkv_h"], params["wo_h"], params["bo"],
      params["w1_t"], params["b1"], params["w2_t"], params["b2"])

    return out_flat.reshape(S, B, E)


# --------------------------- parameter helpers ------------------------------ #

def init_raw_params(key, d_model, nhead, dim_feedforward, dtype=jnp.float32):
    """Deterministic synthetic parameters with PyTorch-equivalent shapes."""
    ks = jax.random.split(key, 8)
    E, F = d_model, dim_feedforward
    scale = 0.05
    return {
        "in_proj_w": jax.random.normal(ks[0], (3 * E, E), dtype) * scale,
        "in_proj_b": jax.random.normal(ks[1], (3 * E,), dtype) * scale,
        "out_proj_w": jax.random.normal(ks[2], (E, E), dtype) * scale,
        "out_proj_b": jax.random.normal(ks[3], (E,), dtype) * scale,
        "w1": jax.random.normal(ks[4], (F, E), dtype) * scale,
        "b1": jax.random.normal(ks[5], (F,), dtype) * scale,
        "w2": jax.random.normal(ks[6], (E, F), dtype) * scale,
        "b2": jax.random.normal(ks[7], (E,), dtype) * scale,
    }


def prepare_kernel_params(raw, d_model, nhead):
    """One-time host-side weight layout transform (all costs outside the kernel)."""
    E = d_model
    H = nhead
    dh = E // H
    F = raw["w1"].shape[0]
    q_scale = 1.0 / (dh ** 0.5)     # folded into Wq / bq -> no scale mul in kernel

    Wq = raw["in_proj_w"][:E]
    Wk = raw["in_proj_w"][E:2 * E]
    Wv = raw["in_proj_w"][2 * E:]
    bq = raw["in_proj_b"][:E]
    bk = raw["in_proj_b"][E:2 * E]
    bv = raw["in_proj_b"][2 * E:]

    def per_head_t(W):  # (E, E) -> (H, E, dh): W[h*dh:(h+1)*dh, :].T per head
        return jnp.transpose(W.reshape(H, dh, E), (0, 2, 1))

    wqkv_h = jnp.concatenate(
        [per_head_t(Wq) * q_scale, per_head_t(Wk), per_head_t(Wv)], axis=-1)
    bqkv_h = jnp.concatenate(
        [bq.reshape(H, 1, dh) * q_scale,
         bk.reshape(H, 1, dh),
         bv.reshape(H, 1, dh)], axis=-1)

    # Wo[:, h*dh:(h+1)*dh].T per head -> (H, dh, E); summing heads == concat.
    wo_h = jnp.transpose(raw["out_proj_w"].reshape(E, H, dh), (1, 2, 0))

    return {
        "wqkv_h": wqkv_h,
        "bqkv_h": bqkv_h,
        "wo_h": wo_h,
        "bo": raw["out_proj_b"].reshape(1, E),
        "w1_t": raw["w1"].T,
        "b1": raw["b1"].reshape(1, F),
        "w2_t": raw["w2"].T,
        "b2": raw["b2"].reshape(1, E),
    }


# ---------------------------- pure-JAX reference ---------------------------- #

def reference_layer(x_sbe, raw, *, nhead):
    S, B, E = x_sbe.shape
    H = nhead
    dh = E // H
    Wi, bi = raw["in_proj_w"], raw["in_proj_b"]
    q = jnp.einsum('sbe,fe->sbf', x_sbe, Wi[:E]) + bi[:E]
    k = jnp.einsum('sbe,fe->sbf', x_sbe, Wi[E:2 * E]) + bi[E:2 * E]
    v = jnp.einsum('sbe,fe->sbf', x_sbe, Wi[2 * E:]) + bi[2 * E:]
    q = q * (dh ** -0.5)
    qh = q.reshape(S, B, H, dh)
    kh = k.reshape(S, B, H, dh)
    vh = v.reshape(S, B, H, dh)
    logits = jnp.einsum('sbhd,tbhd->bhst', qh, kh)
    p = jax.nn.softmax(logits, axis=-1)
    ctx = jnp.einsum('bhst,tbhd->sbhd', p, vh).reshape(S, B, E)
    attn = jnp.einsum('sbe,fe->sbf', ctx, raw["out_proj_w"]) + raw["out_proj_b"]
    h1 = jax.nn.relu(jnp.einsum('sbe,fe->sbf', attn, raw["w1"]) + raw["b1"])
    return jnp.einsum('sbf,ef->sbe', h1, raw["w2"]) + raw["b2"]


# --------------------------------- main ------------------------------------- #

if __name__ == "__main__":
    S, B, E = 8, 2, 32           # seq, batch, d_model
    NHEAD = 4
    FF = 64                      # dim_feedforward

    key = jax.random.PRNGKey(0)
    k_x, k_p = jax.random.split(key)
    x = jax.random.normal(k_x, (S, B, E), jnp.float32)   # seq-first like PyTorch MHA
    raw = init_raw_params(k_p, E, NHEAD, FF)
    params = prepare_kernel_params(raw, E, NHEAD)

    fwd = jax.jit(functools.partial(custom_encoder_layer, nhead=NHEAD))
    y = fwd(x, params)
    jax.block_until_ready(y)

    assert y.shape == (S, B, E), y.shape
    assert jnp.all(jnp.isfinite(y))

    y_ref = reference_layer(x, raw, nhead=NHEAD)
    max_err = float(jnp.max(jnp.abs(y - y_ref)))
    assert max_err < 2e-2, f"max abs error vs reference: {max_err}"

    print("KERNEL_OK")
</pallas_src>

<mosaic_0001>
module attributes {stable_mosaic.version = 11 : i64} {
  func.func @encoder_layer_kernel(%arg0: i32, %arg1: memref<8x64xf32, #tpu.memory_space<vmem>>, %arg2: memref<4x32x24xf32, #tpu.memory_space<vmem>>, %arg3: memref<4x1x24xf32, #tpu.memory_space<vmem>>, %arg4: memref<4x8x32xf32, #tpu.memory_space<vmem>>, %arg5: memref<1x32xf32, #tpu.memory_space<vmem>>, %arg6: memref<32x64xf32, #tpu.memory_space<vmem>>, %arg7: memref<1x64xf32, #tpu.memory_space<vmem>>, %arg8: memref<64x32xf32, #tpu.memory_space<vmem>>, %arg9: memref<1x32xf32, #tpu.memory_space<vmem>>, %arg10: memref<8x64xf32, #tpu.memory_space<vmem>>) attributes {dimension_semantics = [#tpu.dimension_semantics<arbitrary>], iteration_bounds = array<i64: 1>, scalar_prefetch = 0 : i64, scratch_operands = 0 : i64, tpu.core_type = #tpu.core_type<tc>, window_params = [{pipeline_mode = #tpu.pipeline_mode<synchronous>, transform_indices = @transform_0, window_bounds = array<i64: 8, 64>}, {pipeline_mode = #tpu.pipeline_mode<synchronous>, transform_indices = @transform_1, window_bounds = array<i64: 4, 32, 24>}, {pipeline_mode = #tpu.pipeline_mode<synchronous>, transform_indices = @transform_2, window_bounds = array<i64: 4, 1, 24>}, {pipeline_mode = #tpu.pipeline_mode<synchronous>, transform_indices = @transform_3, window_bounds = array<i64: 4, 8, 32>}, {pipeline_mode = #tpu.pipeline_mode<synchronous>, transform_indices = @transform_4, window_bounds = array<i64: 1, 32>}, {pipeline_mode = #tpu.pipeline_mode<synchronous>, transform_indices = @transform_5, window_bounds = array<i64: 32, 64>}, {pipeline_mode = #tpu.pipeline_mode<synchronous>, transform_indices = @transform_6, window_bounds = array<i64: 1, 64>}, {pipeline_mode = #tpu.pipeline_mode<synchronous>, transform_indices = @transform_7, window_bounds = array<i64: 64, 32>}, {pipeline_mode = #tpu.pipeline_mode<synchronous>, transform_indices = @transform_8, window_bounds = array<i64: 1, 32>}, {pipeline_mode = #tpu.pipeline_mode<synchronous>, transform_indices = @transform_9, window_bounds = array<i64: 8, 64>}]} {
    %c0 = arith.constant 0 : index
    %c0_0 = arith.constant 0 : index
    %0 = vector.load %arg1[%c0, %c0_0] : memref<8x64xf32, #tpu.memory_space<vmem>>, vector<8x64xf32>
    %c0_1 = arith.constant 0 : index
    %c0_2 = arith.constant 0 : index
    %c0_3 = arith.constant 0 : index
    %1 = vector.load %arg2[%c0_1, %c0_2, %c0_3] : memref<4x32x24xf32, #tpu.memory_space<vmem>>, vector<4x32x24xf32>
    %c0_4 = arith.constant 0 : index
    %c0_5 = arith.constant 0 : index
    %c0_6 = arith.constant 0 : index
    %2 = vector.load %arg3[%c0_4, %c0_5, %c0_6] : memref<4x1x24xf32, #tpu.memory_space<vmem>>, vector<4x1x24xf32>
    %c0_7 = arith.constant 0 : index
    %c0_8 = arith.constant 0 : index
    %c0_9 = arith.constant 0 : index
    %3 = vector.load %arg4[%c0_7, %c0_8, %c0_9] : memref<4x8x32xf32, #tpu.memory_space<vmem>>, vector<4x8x32xf32>
    %c0_10 = arith.constant 0 : index
    %c0_11 = arith.constant 0 : index
    %4 = vector.load %arg5[%c0_10, %c0_11] : memref<1x32xf32, #tpu.memory_space<vmem>>, vector<1x32xf32>
    %5 = vector.extract_strided_slice %0 {offsets = [0, 0], sizes = [8, 32], strides = [1, 1]} : vector<8x64xf32> to vector<8x32xf32>
    %6 = vector.shape_cast %5 : vector<8x32xf32> to vector<1x8x32xf32>
    %7 = vector.shape_cast %6 : vector<1x8x32xf32> to vector<1x8x32xf32>
    %8 = vector.broadcast %7 : vector<1x8x32xf32> to vector<4x8x32xf32>
    %cst = arith.constant dense<0.000000e+00> : vector<4x8x24xf32>
    %9 = tpu.matmul %8, %1, %cst {dimension_numbers = #tpu.dot_dimension_numbers<[2], [1], [1], [2], [0, 0, 0, 1, 1, 2], [0], [0]>} : vector<4x8x32xf32>, vector<4x32x24xf32>, vector<4x8x24xf32> -> vector<4x8x24xf32>
    %10 = vector.broadcast %2 : vector<4x1x24xf32> to vector<4x8x24xf32>
    %11 = arith.addf %9, %10 : vector<4x8x24xf32>
    %12 = vector.extract_strided_slice %11 {offsets = [0, 0, 0], sizes = [4, 8, 8], strides = [1, 1, 1]} : vector<4x8x24xf32> to vector<4x8x8xf32>
    %13 = vector.extract_strided_slice %11 {offsets = [0, 0, 8], sizes = [4, 8, 8], strides = [1, 1, 1]} : vector<4x8x24xf32> to vector<4x8x8xf32>
    %14 = vector.extract_strided_slice %11 {offsets = [0, 0, 16], sizes = [4, 8, 8], strides = [1, 1, 1]} : vector<4x8x24xf32> to vector<4x8x8xf32>
    %cst_12 = arith.constant dense<0.000000e+00> : vector<4x8x8xf32>
    %15 = tpu.matmul %12, %13, %cst_12 {dimension_numbers = #tpu.dot_dimension_numbers<[2], [2], [1], [1], [0, 0, 0, 1, 1, 1], [0], [0]>} : vector<4x8x8xf32>, vector<4x8x8xf32>, vector<4x8x8xf32> -> vector<4x8x8xf32>
    %cst_13 = arith.constant dense<0xFF800000> : vector<4x8xf32>
    %16 = vector.multi_reduction <maximumf>, %15, %cst_13 [2] : vector<4x8x8xf32> to vector<4x8xf32>
    %17 = vector.shape_cast %16 : vector<4x8xf32> to vector<4x8x1xf32>
    %18 = vector.broadcast %17 : vector<4x8x1xf32> to vector<4x8x8xf32>
    %19 = arith.subf %15, %18 : vector<4x8x8xf32>
    %20 = math.exp %19 : vector<4x8x8xf32>
    %cst_14 = arith.constant dense<0.000000e+00> : vector<4x8xf32>
    %21 = vector.multi_reduction <add>, %20, %cst_14 [2] : vector<4x8x8xf32> to vector<4x8xf32>
    %22 = vector.shape_cast %21 : vector<4x8xf32> to vector<4x8x1xf32>
    %23 = tpu.reciprocal %22 {approx = true} : vector<4x8x1xf32> -> vector<4x8x1xf32>
    %24 = vector.broadcast %23 : vector<4x8x1xf32> to vector<4x8x8xf32>
    %25 = arith.mulf %20, %24 : vector<4x8x8xf32>
    %cst_15 = arith.constant dense<0.000000e+00> : vector<4x8x8xf32>
    %26 = tpu.matmul %25, %14, %cst_15 {dimension_numbers = #tpu.dot_dimension_numbers<[2], [1], [1], [2], [0, 0, 0, 1, 1, 2], [0], [0]>} : vector<4x8x8xf32>, vector<4x8x8xf32>, vector<4x8x8xf32> -> vector<4x8x8xf32>
    %cst_16 = arith.constant dense<0.000000e+00> : vector<4x8x32xf32>
    %27 = tpu.matmul %26, %3, %cst_16 {dimension_numbers = #tpu.dot_dimension_numbers<[2], [1], [1], [2], [0, 0, 0, 1, 1, 2], [0], [0]>} : vector<4x8x8xf32>, vector<4x8x32xf32>, vector<4x8x32xf32> -> vector<4x8x32xf32>
    %cst_17 = arith.constant dense<0.000000e+00> : vector<8x32xf32>
    %28 = vector.multi_reduction <add>, %27, %cst_17 [0] : vector<4x8x32xf32> to vector<8x32xf32>
    %29 = vector.broadcast %4 : vector<1x32xf32> to vector<8x32xf32>
    %30 = arith.addf %28, %29 : vector<8x32xf32>
    %31 = vector.extract_strided_slice %0 {offsets = [0, 32], sizes = [8, 32], strides = [1, 1]} : vector<8x64xf32> to vector<8x32xf32>
    %32 = vector.shape_cast %31 : vector<8x32xf32> to vector<1x8x32xf32>
    %33 = vector.shape_cast %32 : vector<1x8x32xf32> to vector<1x8x32xf32>
    %34 = vector.broadcast %33 : vector<1x8x32xf32> to vector<4x8x32xf32>
    %cst_18 = arith.constant dense<0.000000e+00> : vector<4x8x24xf32>
    %35 = tpu.matmul %34, %1, %cst_18 {dimension_numbers = #tpu.dot_dimension_numbers<[2], [1], [1], [2], [0, 0, 0, 1, 1, 2], [0], [0]>} : vector<4x8x32xf32>, vector<4x32x24xf32>, vector<4x8x24xf32> -> vector<4x8x24xf32>
    %36 = vector.broadcast %2 : vector<4x1x24xf32> to vector<4x8x24xf32>
    %37 = arith.addf %35, %36 : vector<4x8x24xf32>
    %38 = vector.extract_strided_slice %37 {offsets = [0, 0, 0], sizes = [4, 8, 8], strides = [1, 1, 1]} : vector<4x8x24xf32> to vector<4x8x8xf32>
    %39 = vector.extract_strided_slice %37 {offsets = [0, 0, 8], sizes = [4, 8, 8], strides = [1, 1, 1]} : vector<4x8x24xf32> to vector<4x8x8xf32>
    %40 = vector.extract_strided_slice %37 {offsets = [0, 0, 16], sizes = [4, 8, 8], strides = [1, 1, 1]} : vector<4x8x24xf32> to vector<4x8x8xf32>
    %cst_19 = arith.constant dense<0.000000e+00> : vector<4x8x8xf32>
    %41 = tpu.matmul %38, %39, %cst_19 {dimension_numbers = #tpu.dot_dimension_numbers<[2], [2], [1], [1], [0, 0, 0, 1, 1, 1], [0], [0]>} : vector<4x8x8xf32>, vector<4x8x8xf32>, vector<4x8x8xf32> -> vector<4x8x8xf32>
    %cst_20 = arith.constant dense<0xFF800000> : vector<4x8xf32>
    %42 = vector.multi_reduction <maximumf>, %41, %cst_20 [2] : vector<4x8x8xf32> to vector<4x8xf32>
    %43 = vector.shape_cast %42 : vector<4x8xf32> to vector<4x8x1xf32>
    %44 = vector.broadcast %43 : vector<4x8x1xf32> to vector<4x8x8xf32>
    %45 = arith.subf %41, %44 : vector<4x8x8xf32>
    %46 = math.exp %45 : vector<4x8x8xf32>
    %cst_21 = arith.constant dense<0.000000e+00> : vector<4x8xf32>
    %47 = vector.multi_reduction <add>, %46, %cst_21 [2] : vector<4x8x8xf32> to vector<4x8xf32>
    %48 = vector.shape_cast %47 : vector<4x8xf32> to vector<4x8x1xf32>
    %49 = tpu.reciprocal %48 {approx = true} : vector<4x8x1xf32> -> vector<4x8x1xf32>
    %50 = vector.broadcast %49 : vector<4x8x1xf32> to vector<4x8x8xf32>
    %51 = arith.mulf %46, %50 : vector<4x8x8xf32>
    %cst_22 = arith.constant dense<0.000000e+00> : vector<4x8x8xf32>
    %52 = tpu.matmul %51, %40, %cst_22 {dimension_numbers = #tpu.dot_dimension_numbers<[2], [1], [1], [2], [0, 0, 0, 1, 1, 2], [0], [0]>} : vector<4x8x8xf32>, vector<4x8x8xf32>, vector<4x8x8xf32> -> vector<4x8x8xf32>
    %cst_23 = arith.constant dense<0.000000e+00> : vector<4x8x32xf32>
    %53 = tpu.matmul %52, %3, %cst_23 {dimension_numbers = #tpu.dot_dimension_numbers<[2], [1], [1], [2], [0, 0, 0, 1, 1, 2], [0], [0]>} : vector<4x8x8xf32>, vector<4x8x32xf32>, vector<4x8x32xf32> -> vector<4x8x32xf32>
    %cst_24 = arith.constant dense<0.000000e+00> : vector<8x32xf32>
    %54 = vector.multi_reduction <add>, %53, %cst_24 [0] : vector<4x8x32xf32> to vector<8x32xf32>
    %55 = vector.broadcast %4 : vector<1x32xf32> to vector<8x32xf32>
    %56 = arith.addf %54, %55 : vector<8x32xf32>
    %57 = tpu.concatenate %30, %56 in 0 : vector<8x32xf32>, vector<8x32xf32> -> vector<16x32xf32>
    %c0_25 = arith.constant 0 : index
    %c0_26 = arith.constant 0 : index
    %58 = vector.load %arg6[%c0_25, %c0_26] : memref<32x64xf32, #tpu.memory_space<vmem>>, vector<32x64xf32>
    %cst_27 = arith.constant dense<0.000000e+00> : vector<16x64xf32>
    %59 = tpu.matmul %57, %58, %cst_27 {dimension_numbers = #tpu.dot_dimension_numbers<[1], [0], [0], [1], [0, 0, 1, 1], [], []>} : vector<16x32xf32>, vector<32x64xf32>, vector<16x64xf32> -> vector<16x64xf32>
    %c0_28 = arith.constant 0 : index
    %c0_29 = arith.constant 0 : index
    %60 = vector.load %arg7[%c0_28, %c0_29] : memref<1x64xf32, #tpu.memory_space<vmem>>, vector<1x64xf32>
    %61 = vector.broadcast %60 : vector<1x64xf32> to vector<16x64xf32>
    %62 = arith.addf %59, %61 : vector<16x64xf32>
    %cst_30 = arith.constant 0.000000e+00 : f32
    %63 = vector.broadcast %cst_30 : f32 to vector<16x64xf32>
    %64 = arith.maximumf %62, %63 : vector<16x64xf32>
    %c0_31 = arith.constant 0 : index
    %c0_32 = arith.constant 0 : index
    %65 = vector.load %arg8[%c0_31, %c0_32] : memref<64x32xf32, #tpu.memory_space<vmem>>, vector<64x32xf32>
    %cst_33 = arith.constant dense<0.000000e+00> : vector<16x32xf32>
    %66 = tpu.matmul %64, %65, %cst_33 {dimension_numbers = #tpu.dot_dimension_numbers<[1], [0], [0], [1], [0, 0, 1, 1], [], []>} : vector<16x64xf32>, vector<64x32xf32>, vector<16x32xf32> -> vector<16x32xf32>
    %c0_34 = arith.constant 0 : index
    %c0_35 = arith.constant 0 : index
    %67 = vector.load %arg9[%c0_34, %c0_35] : memref<1x32xf32, #tpu.memory_space<vmem>>, vector<1x32xf32>
    %68 = vector.broadcast %67 : vector<1x32xf32> to vector<16x32xf32>
    %69 = arith.addf %66, %68 : vector<16x32xf32>
    %70 = vector.extract_strided_slice %69 {offsets = [0, 0], sizes = [8, 32], strides = [1, 1]} : vector<16x32xf32> to vector<8x32xf32>
    %c0_36 = arith.constant 0 : index
    %c0_37 = arith.constant 0 : index
    %71 = vector.load %arg10[%c0_36, %c0_37] : memref<8x64xf32, #tpu.memory_space<vmem>>, vector<8x32xf32>
    tpu.vector_store %arg10[%c0_36, %c0_37], %70 {strides = array<i32>} : memref<8x64xf32, #tpu.memory_space<vmem>>, vector<8x32xf32>,
    %72 = vector.extract_strided_slice %69 {offsets = [8, 0], sizes = [8, 32], strides = [1, 1]} : vector<16x32xf32> to vector<8x32xf32>
    %c0_38 = arith.constant 0 : index
    %c32 = arith.constant 32 : index
    %73 = vector.load %arg10[%c0_38, %c32] : memref<8x64xf32, #tpu.memory_space<vmem>>, vector<8x32xf32>
    tpu.vector_store %arg10[%c0_38, %c32], %72 {strides = array<i32>} : memref<8x64xf32, #tpu.memory_space<vmem>>, vector<8x32xf32>,
    return
  }
  func.func @transform_0(%arg0: i32) -> (i32, i32) {
    %c0_i32 = arith.constant 0 : i32
    %c0_i32_0 = arith.constant 0 : i32
    %c0_i32_1 = arith.constant 0 : i32
    return %c0_i32, %c0_i32_0 : i32, i32
  }
  func.func @transform_1(%arg0: i32) -> (i32, i32, i32) {
    %c0_i32 = arith.constant 0 : i32
    %c0_i32_0 = arith.constant 0 : i32
    %c0_i32_1 = arith.constant 0 : i32
    %c0_i32_2 = arith.constant 0 : i32
    return %c0_i32, %c0_i32_0, %c0_i32_1 : i32, i32, i32
  }
  func.func @transform_2(%arg0: i32) -> (i32, i32, i32) {
    %c0_i32 = arith.constant 0 : i32
    %c0_i32_0 = arith.constant 0 : i32
    %c0_i32_1 = arith.constant 0 : i32
    %c0_i32_2 = arith.constant 0 : i32
    return %c0_i32, %c0_i32_0, %c0_i32_1 : i32, i32, i32
  }
  func.func @transform_3(%arg0: i32) -> (i32, i32, i32) {
    %c0_i32 = arith.constant 0 : i32
    %c0_i32_0 = arith.constant 0 : i32
    %c0_i32_1 = arith.constant 0 : i32
    %c0_i32_2 = arith.constant 0 : i32
    return %c0_i32, %c0_i32_0, %c0_i32_1 : i32, i32, i32
  }
  func.func @transform_4(%arg0: i32) -> (i32, i32) {
    %c0_i32 = arith.constant 0 : i32
    %c0_i32_0 = arith.constant 0 : i32
    %c0_i32_1 = arith.constant 0 : i32
    return %c0_i32, %c0_i32_0 : i32, i32
  }
  func.func @transform_5(%arg0: i32) -> (i32, i32) {
    %c0_i32 = arith.constant 0 : i32
    %c0_i32_0 = arith.constant 0 : i32
    %c0_i32_1 = arith.constant 0 : i32
    return %c0_i32, %c0_i32_0 : i32, i32
  }
  func.func @transform_6(%arg0: i32) -> (i32, i32) {
    %c0_i32 = arith.constant 0 : i32
    %c0_i32_0 = arith.constant 0 : i32
    %c0_i32_1 = arith.constant 0 : i32
    return %c0_i32, %c0_i32_0 : i32, i32
  }
  func.func @transform_7(%arg0: i32) -> (i32, i32) {
    %c0_i32 = arith.constant 0 : i32
    %c0_i32_0 = arith.constant 0 : i32
    %c0_i32_1 = arith.constant 0 : i32
    return %c0_i32, %c0_i32_0 : i32, i32
  }
  func.func @transform_8(%arg0: i32) -> (i32, i32) {
    %c0_i32 = arith.constant 0 : i32
    %c0_i32_0 = arith.constant 0 : i32
    %c0_i32_1 = arith.constant 0 : i32
    return %c0_i32, %c0_i32_0 : i32, i32
  }
  func.func @transform_9(%arg0: i32) -> (i32, i32) {
    %c0_i32 = arith.constant 0 : i32
    %c0_i32_0 = arith.constant 0 : i32
    %c0_i32_1 = arith.constant 0 : i32
    return %c0_i32, %c0_i32_0 : i32, i32
  }
}

</mosaic_0001>

<llo_original>
// kernel: custom_encoder_layer.1
$region0: #{custom_encoder_layer.1}
  #allocation0 [shape = 'u32[]', space=smem, size = 0x4, offset = 0x4, fixed_abs, tag = 'smem constant byte address 0x4 - core index']
  #allocation1 [shape = 'u32[72,128]{1,0:T(1,128)}', space=vmem, size = 0x9000, scoped, tag = 'internal scratch']
  %s0 = inlined_call_operand.vmem [shape: f32[8,64], index: 0, kind: input, shape index: {}]
  %s1 = inlined_call_operand.vmem [shape: f32[4,32,24], index: 1, kind: input, shape index: {}]
  %s2 = inlined_call_operand.vmem [shape: f32[4,1,24], index: 2, kind: input, shape index: {}]
  %s3 = inlined_call_operand.vmem [shape: f32[4,8,32], index: 3, kind: input, shape index: {}]
  %s4 = inlined_call_operand.vmem [shape: f32[1,32], index: 4, kind: input, shape index: {}]
  %s5 = inlined_call_operand.vmem [shape: f32[32,64], index: 5, kind: input, shape index: {}]
  %s6 = inlined_call_operand.vmem [shape: f32[1,64], index: 6, kind: input, shape index: {}]
  %s7 = inlined_call_operand.vmem [shape: f32[64,32], index: 7, kind: input, shape index: {}]
  %s8 = inlined_call_operand.vmem [shape: f32[1,32], index: 8, kind: input, shape index: {}]
  %s9 = inlined_call_operand.vmem [shape: f32[8,64], index: 9, kind: output, shape index: {}]
  %s10 = sld [smem:[#allocation0]]
  $region46: #{custom_encoder_layer.1} parent=0
    _
  %s12 = ssub.s32 1, %s10
  %s13 = scalar_select 0, %s12, %s10
  // Predicated region
  $region2: #{custom_encoder_layer.1} parent=0 // pred_check
    _
  $region3: #{custom_encoder_layer.1} parent=0 // pred_check_branch
    %15 = sbr.rel (0) target = $region5
  $region4: #{custom_encoder_layer.1} parent=0 // pred_region
    _
  $region5: #{custom_encoder_layer.1} parent=0 // pred_fallthru
    _
  // Predicated region
  $region6: #{custom_encoder_layer.1} parent=0 // pred_check
    _
  $region7: #{custom_encoder_layer.1} parent=0 // pred_check_branch
    %17 = sbr.rel (0) target = $region9
  $region8: #{custom_encoder_layer.1} parent=0 // pred_region
    _
  $region9: #{custom_encoder_layer.1} parent=0 // pred_fallthru
    _
  // Predicated region
  $region10: #{custom_encoder_layer.1} parent=0 // pred_check
    _
  $region11: #{custom_encoder_layer.1} parent=0 // pred_check_branch
    %19 = sbr.rel (0) target = $region13
  $region12: #{custom_encoder_layer.1} parent=0 // pred_region
    _
  $region13: #{custom_encoder_layer.1} parent=0 // pred_fallthru
    _
  // Predicated region
  $region14: #{custom_encoder_layer.1} parent=0 // pred_check
    _
  $region15: #{custom_encoder_layer.1} parent=0 // pred_check_branch
    %21 = sbr.rel (0) target = $region17
  $region16: #{custom_encoder_layer.1} parent=0 // pred_region
    _
  $region17: #{custom_encoder_layer.1} parent=0 // pred_fallthru
    _
  // Predicated region
  $region18: #{custom_encoder_layer.1} parent=0 // pred_check
    _
  $region19: #{custom_encoder_layer.1} parent=0 // pred_check_branch
    %23 = sbr.rel (0) target = $region21
  $region20: #{custom_encoder_layer.1} parent=0 // pred_region
    _
  $region21: #{custom_encoder_layer.1} parent=0 // pred_fallthru
    _
  // Predicated region
  $region22: #{custom_encoder_layer.1} parent=0 // pred_check
    _
  $region23: #{custom_encoder_layer.1} parent=0 // pred_check_branch
    %25 = sbr.rel (0) target = $region25
  $region24: #{custom_encoder_layer.1} parent=0 // pred_region
    _
  $region25: #{custom_encoder_layer.1} parent=0 // pred_fallthru
    _
  // Predicated region
  $region26: #{custom_encoder_layer.1} parent=0 // pred_check
    _
  $region27: #{custom_encoder_layer.1} parent=0 // pred_check_branch
    %27 = sbr.rel (0) target = $region29
  $region28: #{custom_encoder_layer.1} parent=0 // pred_region
    _
  $region29: #{custom_encoder_layer.1} parent=0 // pred_fallthru
    _
  // Predicated region
  $region30: #{custom_encoder_layer.1} parent=0 // pred_check
    _
  $region31: #{custom_encoder_layer.1} parent=0 // pred_check_branch
    %29 = sbr.rel (0) target = $region33
  $region32: #{custom_encoder_layer.1} parent=0 // pred_region
    _
  $region33: #{custom_encoder_layer.1} parent=0 // pred_fallthru
    _
  // Predicated region
  $region34: #{custom_encoder_layer.1} parent=0 // pred_check
    _
  $region35: #{custom_encoder_layer.1} parent=0 // pred_check_branch
    %31 = sbr.rel (0) target = $region37
  $region36: #{custom_encoder_layer.1} parent=0 // pred_region
    _
  $region37: #{custom_encoder_layer.1} parent=0 // pred_fallthru
    _
  %v32 = vld [vmem:[%s0] sm:$0xff]
  %v33 = vld [vmem:[%s1] sm:$0xff]
  %v34 = vld [vmem:[%s1 + $0x8] sm:$0xff]
  %v35 = vld [vmem:[%s1 + $0x10] sm:$0xff]
  %v36 = vld [vmem:[%s1 + $0x18] sm:$0xff]
  %v37 = vld [vmem:[%s1 + $0x20] sm:$0xff]
  %v38 = vld [vmem:[%s1 + $0x28] sm:$0xff]
  %v39 = vld [vmem:[%s1 + $0x30] sm:$0xff]
  %v40 = vld [vmem:[%s1 + $0x38] sm:$0xff]
  %v41 = vld [vmem:[%s1 + $0x40] sm:$0xff]
  %v42 = vld [vmem:[%s1 + $0x48] sm:$0xff]
  %v43 = vld [vmem:[%s1 + $0x50] sm:$0xff]
  %v44 = vld [vmem:[%s1 + $0x58] sm:$0xff]
  %v45 = vld [vmem:[%s1 + $0x60] sm:$0xff]
  %v46 = vld [vmem:[%s1 + $0x68] sm:$0xff]
  %v47 = vld [vmem:[%s1 + $0x70] sm:$0xff]
  %v48 = vld [vmem:[%s1 + $0x78] sm:$0xff]
  %v49 = vld [vmem:[%s2] sm:$0x1]
  %v50 = vld [vmem:[%s2 + $0x1] sm:$0x1]
  %v51 = vld [vmem:[%s2 + $0x2] sm:$0x1]
  %v52 = vld [vmem:[%s2 + $0x3] sm:$0x1]
  %v53 = vld [vmem:[%s3] sm:$0xff]
  %v54 = vld [vmem:[%s3 + $0x8] sm:$0xff]
  %v55 = vld [vmem:[%s3 + $0x10] sm:$0xff]
  %v56 = vld [vmem:[%s3 + $0x18] sm:$0xff]
  %v57 = vld [vmem:[%s4] sm:$0x1]
  %v62 = vperm.slane %v49, 0
  %v63 = vperm.slane %v50, 0
  %v64 = vperm.slane %v51, 0
  %v65 = vperm.slane %v52, 0
  %vm70 = vcmask 261120
  %v72 = vsel %vm70, %v32, 0
  %74 = vmatpush.msra.mxu0 0.0
  %75 = vmatpush.msra.mxu0 0.0
  %76 = vmatpush.msra.mxu0 0.0
  %77 = vmatpush.msra.mxu0 0.0
  %78 = vmatpush.msra.mxu0 0.0
  %79 = vmatpush.msra.mxu0 0.0
  %80 = vmatpush.msra.mxu0 0.0
  %81 = vmatpush.msra.mxu0 0.0
  %82 = vmatpush.msra.mxu0 0.0
  %83 = vmatpush.msra.mxu0 0.0
  %84 = vmatpush.msra.mxu0 0.0
  %85 = vmatpush.msra.mxu0 0.0
  %86 = vmatpush.msra.mxu0 %v36
  %87 = vmatpush.msra.mxu0 %v35
  %88 = vmatpush.msra.mxu0 %v34
  %89 = vmatpush.msra.mxu0 %v33
  %90 = vmatmul.f32.gmra.mxu0 %v72
  %v91 = vpop.f32.mrf.mxu0
  %v92 = vadd.f32 %v62, %v91
  %93 = vdwg.mxu0
  %94 = vmatpush.msra.mxu0 0.0
  %95 = vmatpush.msra.mxu0 0.0
  %96 = vmatpush.msra.mxu0 0.0
  %97 = vmatpush.msra.mxu0 0.0
  %98 = vmatpush.msra.mxu0 0.0
  %99 = vmatpush.msra.mxu0 0.0
  %100 = vmatpush.msra.mxu0 0.0
  %101 = vmatpush.msra.mxu0 0.0
  %102 = vmatpush.msra.mxu0 0.0
  %103 = vmatpush.msra.mxu0 0.0
  %104 = vmatpush.msra.mxu0 0.0
  %105 = vmatpush.msra.mxu0 0.0
  %106 = vmatpush.msra.mxu0 %v40
  %107 = vmatpush.msra.mxu0 %v39
  %108 = vmatpush.msra.mxu0 %v38
  %109 = vmatpush.msra.mxu0 %v37
  %110 = vmatmul.f32.gmra.mxu0 %v72
  %v111 = vpop.f32.mrf.mxu0
  %v112 = vadd.f32 %v63, %v111
  %113 = vdwg.mxu0
  %114 = vmatpush.msra.mxu0 0.0
  %115 = vmatpush.msra.mxu0 0.0
  %116 = vmatpush.msra.mxu0 0.0
  %117 = vmatpush.msra.mxu0 0.0
  %118 = vmatpush.msra.mxu0 0.0
  %119 = vmatpush.msra.mxu0 0.0
  %120 = vmatpush.msra.mxu0 0.0
  %121 = vmatpush.msra.mxu0 0.0
  %122 = vmatpush.msra.mxu0 0.0
  %123 = vmatpush.msra.mxu0 0.0
  %124 = vmatpush.msra.mxu0 0.0
  %125 = vmatpush.msra.mxu0 0.0
  %126 = vmatpush.msra.mxu0 %v44
  %127 = vmatpush.msra.mxu0 %v43
  %128 = vmatpush.msra.mxu0 %v42
  %129 = vmatpush.msra.mxu0 %v41
  %130 = vmatmul.f32.gmra.mxu0 %v72
  %v131 = vpop.f32.mrf.mxu0
  %v132 = vadd.f32 %v64, %v131
  %133 = vdwg.mxu0
  %134 = vmatpush.msra.mxu0 0.0
  %135 = vmatpush.msra.mxu0 0.0
  %136 = vmatpush.msra.mxu0 0.0
  %137 = vmatpush.msra.mxu0 0.0
  %138 = vmatpush.msra.mxu0 0.0
  %139 = vmatpush.msra.mxu0 0.0
  %140 = vmatpush.msra.mxu0 0.0
  %141 = vmatpush.msra.mxu0 0.0
  %142 = vmatpush.msra.mxu0 0.0
  %143 = vmatpush.msra.mxu0 0.0
  %144 = vmatpush.msra.mxu0 0.0
  %145 = vmatpush.msra.mxu0 0.0
  %146 = vmatpush.msra.mxu0 %v48
  %147 = vmatpush.msra.mxu0 %v47
  %148 = vmatpush.msra.mxu0 %v46
  %149 = vmatpush.msra.mxu0 %v45
  %150 = vmatmul.f32.gmra.mxu0 %v72
  %v151 = vpop.f32.mrf.mxu0
  %v152 = vadd.f32 %v65, %v151
  %153 = vdwg.mxu0
  %155 = vrot.lane.b32.xlu0 %v92, 120
  %v156 = vpop.permute.xlu0 %155
  %vm157 = vcmask 64512
  %v158 = vsel %vm157, %v92, 0
  %v160 = vsel %vm157, %v156, 0
  %162 = vmatpush.xpose.msra.mxu0 0.0
  %163 = vmatpush.xpose.msra.mxu0 0.0
  %164 = vmatpush.xpose.msra.mxu0 0.0
  %165 = vmatpush.xpose.msra.mxu0 0.0
  %166 = vmatpush.xpose.msra.mxu0 0.0
  %167 = vmatpush.xpose.msra.mxu0 0.0
  %168 = vmatpush.xpose.msra.mxu0 0.0
  %169 = vmatpush.xpose.msra.mxu0 0.0
  %170 = vmatpush.xpose.msra.mxu0 0.0
  %171 = vmatpush.xpose.msra.mxu0 0.0
  %172 = vmatpush.xpose.msra.mxu0 0.0
  %173 = vmatpush.xpose.msra.mxu0 0.0
  %174 = vmatpush.xpose.msra.mxu0 0.0
  %175 = vmatpush.xpose.msra.mxu0 0.0
  %176 = vmatpush.xpose.msra.mxu0 0.0
  %177 = vmatpush.xpose.msra.mxu0 %v160
  %178 = vmatmul.f32.gmra.mxu0 %v158
  %v179 = vpop.f32.mrf.mxu0
  %v180 = vadd.f32 0.0, %v179
  %181 = vdwg.mxu0
  %183 = vrot.lane.b32.xlu0 %v112, 120
  %v184 = vpop.permute.xlu0 %183
  %v185 = vsel %vm157, %v112, 0
  %v187 = vsel %vm157, %v184, 0
  %189 = vmatpush.xpose.msra.mxu0 0.0
  %190 = vmatpush.xpose.msra.mxu0 0.0
  %191 = vmatpush.xpose.msra.mxu0 0.0
  %192 = vmatpush.xpose.msra.mxu0 0.0
  %193 = vmatpush.xpose.msra.mxu0 0.0
  %194 = vmatpush.xpose.msra.mxu0 0.0
  %195 = vmatpush.xpose.msra.mxu0 0.0
  %196 = vmatpush.xpose.msra.mxu0 0.0
  %197 = vmatpush.xpose.msra.mxu0 0.0
  %198 = vmatpush.xpose.msra.mxu0 0.0
  %199 = vmatpush.xpose.msra.mxu0 0.0
  %200 = vmatpush.xpose.msra.mxu0 0.0
  %201 = vmatpush.xpose.msra.mxu0 0.0
  %202 = vmatpush.xpose.msra.mxu0 0.0
  %203 = vmatpush.xpose.msra.mxu0 0.0
  %204 = vmatpush.xpose.msra.mxu0 %v187
  %205 = vmatmul.f32.gmra.mxu0 %v185
  %v206 = vpop.f32.mrf.mxu0
  %v207 = vadd.f32 0.0, %v206
  %208 = vdwg.mxu0
  %210 = vrot.lane.b32.xlu0 %v132, 120
  %v211 = vpop.permute.xlu0 %210
  %v212 = vsel %vm157, %v132, 0
  %v214 = vsel %vm157, %v211, 0
  %216 = vmatpush.xpose.msra.mxu0 0.0
  %217 = vmatpush.xpose.msra.mxu0 0.0
  %218 = vmatpush.xpose.msra.mxu0 0.0
  %219 = vmatpush.xpose.msra.mxu0 0.0
  %220 = vmatpush.xpose.msra.mxu0 0.0
  %221 = vmatpush.xpose.msra.mxu0 0.0
  %222 = vmatpush.xpose.msra.mxu0 0.0
  %223 = vmatpush.xpose.msra.mxu0 0.0
  %224 = vmatpush.xpose.msra.mxu0 0.0
  %225 = vmatpush.xpose.msra.mxu0 0.0
  %226 = vmatpush.xpose.msra.mxu0 0.0
  %227 = vmatpush.xpose.msra.mxu0 0.0
  %228 = vmatpush.xpose.msra.mxu0 0.0
  %229 = vmatpush.xpose.msra.mxu0 0.0
  %230 = vmatpush.xpose.msra.mxu0 0.0
  %231 = vmatpush.xpose.msra.mxu0 %v214
  %232 = vmatmul.f32.gmra.mxu0 %v212
  %v233 = vpop.f32.mrf.mxu0
  %v234 = vadd.f32 0.0, %v233
  %235 = vdwg.mxu0
  %237 = vrot.lane.b32.xlu0 %v152, 120
  %v238 = vpop.permute.xlu0 %237
  %v239 = vsel %vm157, %v152, 0
  %v241 = vsel %vm157, %v238, 0
  %243 = vmatpush.xpose.msra.mxu0 0.0
  %244 = vmatpush.xpose.msra.mxu0 0.0
  %245 = vmatpush.xpose.msra.mxu0 0.0
  %246 = vmatpush.xpose.msra.mxu0 0.0
  %247 = vmatpush.xpose.msra.mxu0 0.0
  %248 = vmatpush.xpose.msra.mxu0 0.0
  %249 = vmatpush.xpose.msra.mxu0 0.0
  %250 = vmatpush.xpose.msra.mxu0 0.0
  %251 = vmatpush.xpose.msra.mxu0 0.0
  %252 = vmatpush.xpose.msra.mxu0 0.0
  %253 = vmatpush.xpose.msra.mxu0 0.0
  %254 = vmatpush.xpose.msra.mxu0 0.0
  %255 = vmatpush.xpose.msra.mxu0 0.0
  %256 = vmatpush.xpose.msra.mxu0 0.0
  %257 = vmatpush.xpose.msra.mxu0 0.0
  %258 = vmatpush.xpose.msra.mxu0 %v241
  %259 = vmatmul.f32.gmra.mxu0 %v239
  %v260 = vpop.f32.mrf.mxu0
  %v261 = vadd.f32 0.0, %v260
  %262 = vdwg.mxu0
  %v263 = vsel %vm157, %v180, -inf
  %264 = vmax.xlane.f32.xlu0 %v263
  %v265 = vpop.xlane.xlu0 %264
  %v266 = vsel %vm157, %v207, -inf
  %267 = vmax.xlane.f32.xlu0 %v266
  %v268 = vpop.xlane.xlu0 %267
  %v269 = vsel %vm157, %v234, -inf
  %270 = vmax.xlane.f32.xlu0 %v269
  %v271 = vpop.xlane.xlu0 %270
  %v272 = vsel %vm157, %v261, -inf
  %273 = vmax.xlane.f32.xlu0 %v272
  %v274 = vpop.xlane.xlu0 %273
  %v275 = vsub.f32 %v180, %v265
  %v276 = vsub.f32 %v207, %v268
  %v277 = vsub.f32 %v234, %v271
  %v278 = vsub.f32 %v261, %v274
  %v279 = vmul.f32 %v275, 1.442695
  %v280 = vpow.pop %v279
  %v281 = vmul.f32 %v276, 1.442695
  %v282 = vpow.pop %v281
  %v283 = vmul.f32 %v277, 1.442695
  %v284 = vpow.pop %v283
  %v285 = vmul.f32 %v278, 1.442695
  %v286 = vpow.pop %v285
  %v287 = vsel %vm157, %v280, 0.0
  %288 = vadd.xlane.f32.xlu0 %v287
  %v289 = vpop.xlane.xlu0 %288
  %v290 = vsel %vm157, %v282, 0.0
  %291 = vadd.xlane.f32.xlu0 %v290
  %v292 = vpop.xlane.xlu0 %291
  %v293 = vsel %vm157, %v284, 0.0
  %294 = vadd.xlane.f32.xlu0 %v293
  %v295 = vpop.xlane.xlu0 %294
  %v296 = vsel %vm157, %v286, 0.0
  %297 = vadd.xlane.f32.xlu0 %v296
  %v298 = vpop.xlane.xlu0 %297
  %v299 = vrcp.pop %v289
  %v300 = vrcp.pop %v292
  %v301 = vrcp.pop %v295
  %v302 = vrcp.pop %v298
  %v303 = vmul.f32 %v280, %v299
  %v304 = vmul.f32 %v282, %v300
  %v305 = vmul.f32 %v284, %v301
  %v306 = vmul.f32 %v286, %v302
  %307 = vrot.lane.b32.xlu0 %v92, 112
  %v308 = vpop.permute.xlu0 %307
  %v311 = vsel %vm157, %v303, 0
  %313 = vmatpush.msra.mxu0 0.0
  %314 = vmatpush.msra.mxu0 0.0
  %315 = vmatpush.msra.mxu0 0.0
  %316 = vmatpush.msra.mxu0 0.0
  %317 = vmatpush.msra.mxu0 0.0
  %318 = vmatpush.msra.mxu0 0.0
  %319 = vmatpush.msra.mxu0 0.0
  %320 = vmatpush.msra.mxu0 0.0
  %321 = vmatpush.msra.mxu0 0.0
  %322 = vmatpush.msra.mxu0 0.0
  %323 = vmatpush.msra.mxu0 0.0
  %324 = vmatpush.msra.mxu0 0.0
  %325 = vmatpush.msra.mxu0 0.0
  %326 = vmatpush.msra.mxu0 0.0
  %327 = vmatpush.msra.mxu0 0.0
  %328 = vmatpush.msra.mxu0 %v308
  %329 = vmatmul.f32.gmra.mxu0 %v311
  %v330 = vpop.f32.mrf.mxu0
  %v331 = vadd.f32 0.0, %v330
  %332 = vdwg.mxu0
  %333 = vrot.lane.b32.xlu0 %v112, 112
  %v334 = vpop.permute.xlu0 %333
  %v337 = vsel %vm157, %v304, 0
  %339 = vmatpush.msra.mxu0 0.0
  %340 = vmatpush.msra.mxu0 0.0
  %341 = vmatpush.msra.mxu0 0.0
  %342 = vmatpush.msra.mxu0 0.0
  %343 = vmatpush.msra.mxu0 0.0
  %344 = vmatpush.msra.mxu0 0.0
  %345 = vmatpush.msra.mxu0 0.0
  %346 = vmatpush.msra.mxu0 0.0
  %347 = vmatpush.msra.mxu0 0.0
  %348 = vmatpush.msra.mxu0 0.0
  %349 = vmatpush.msra.mxu0 0.0
  %350 = vmatpush.msra.mxu0 0.0
  %351 = vmatpush.msra.mxu0 0.0
  %352 = vmatpush.msra.mxu0 0.0
  %353 = vmatpush.msra.mxu0 0.0
  %354 = vmatpush.msra.mxu0 %v334
  %355 = vmatmul.f32.gmra.mxu0 %v337
  %v356 = vpop.f32.mrf.mxu0
  %v357 = vadd.f32 0.0, %v356
  %358 = vdwg.mxu0
  %359 = vrot.lane.b32.xlu0 %v132, 112
  %v360 = vpop.permute.xlu0 %359
  %v363 = vsel %vm157, %v305, 0
  %365 = vmatpush.msra.mxu0 0.0
  %366 = vmatpush.msra.mxu0 0.0
  %367 = vmatpush.msra.mxu0 0.0
  %368 = vmatpush.msra.mxu0 0.0
  %369 = vmatpush.msra.mxu0 0.0
  %370 = vmatpush.msra.mxu0 0.0
  %371 = vmatpush.msra.mxu0 0.0
  %372 = vmatpush.msra.mxu0 0.0
  %373 = vmatpush.msra.mxu0 0.0
  %374 = vmatpush.msra.mxu0 0.0
  %375 = vmatpush.msra.mxu0 0.0
  %376 = vmatpush.msra.mxu0 0.0
  %377 = vmatpush.msra.mxu0 0.0
  %378 = vmatpush.msra.mxu0 0.0
  %379 = vmatpush.msra.mxu0 0.0
  %380 = vmatpush.msra.mxu0 %v360
  %381 = vmatmul.f32.gmra.mxu0 %v363
  %v382 = vpop.f32.mrf.mxu0
  %v383 = vadd.f32 0.0, %v382
  %384 = vdwg.mxu0
  %385 = vrot.lane.b32.xlu0 %v152, 112
  %v386 = vpop.permute.xlu0 %385
  %v389 = vsel %vm157, %v306, 0
  %391 = vmatpush.msra.mxu0 0.0
  %392 = vmatpush.msra.mxu0 0.0
  %393 = vmatpush.msra.mxu0 0.0
  %394 = vmatpush.msra.mxu0 0.0
  %395 = vmatpush.msra.mxu0 0.0
  %396 = vmatpush.msra.mxu0 0.0
  %397 = vmatpush.msra.mxu0 0.0
  %398 = vmatpush.msra.mxu0 0.0
  %399 = vmatpush.msra.mxu0 0.0
  %400 = vmatpush.msra.mxu0 0.0
  %401 = vmatpush.msra.mxu0 0.0
  %402 = vmatpush.msra.mxu0 0.0
  %403 = vmatpush.msra.mxu0 0.0
  %404 = vmatpush.msra.mxu0 0.0
  %405 = vmatpush.msra.mxu0 0.0
  %406 = vmatpush.msra.mxu0 %v386
  %407 = vmatmul.f32.gmra.mxu0 %v389
  %v408 = vpop.f32.mrf.mxu0
  %v409 = vadd.f32 0.0, %v408
  %410 = vdwg.mxu0
  %v412 = vsel %vm157, %v331, 0
  %414 = vmatpush.msra.mxu0 0.0
  %415 = vmatpush.msra.mxu0 0.0
  %416 = vmatpush.msra.mxu0 0.0
  %417 = vmatpush.msra.mxu0 0.0
  %418 = vmatpush.msra.mxu0 0.0
  %419 = vmatpush.msra.mxu0 0.0
  %420 = vmatpush.msra.mxu0 0.0
  %421 = vmatpush.msra.mxu0 0.0
  %422 = vmatpush.msra.mxu0 0.0
  %423 = vmatpush.msra.mxu0 0.0
  %424 = vmatpush.msra.mxu0 0.0
  %425 = vmatpush.msra.mxu0 0.0
  %426 = vmatpush.msra.mxu0 0.0
  %427 = vmatpush.msra.mxu0 0.0
  %428 = vmatpush.msra.mxu0 0.0
  %429 = vmatpush.msra.mxu0 %v53
  %430 = vmatmul.f32.gmra.mxu0 %v412
  %v431 = vpop.f32.mrf.mxu0
  %v432 = vadd.f32 0.0, %v431
  %433 = vdwg.mxu0
  %v435 = vsel %vm157, %v357, 0
  %437 = vmatpush.msra.mxu0 0.0
  %438 = vmatpush.msra.mxu0 0.0
  %439 = vmatpush.msra.mxu0 0.0
  %440 = vmatpush.msra.mxu0 0.0
  %441 = vmatpush.msra.mxu0 0.0
  %442 = vmatpush.msra.mxu0 0.0
  %443 = vmatpush.msra.mxu0 0.0
  %444 = vmatpush.msra.mxu0 0.0
  %445 = vmatpush.msra.mxu0 0.0
  %446 = vmatpush.msra.mxu0 0.0
  %447 = vmatpush.msra.mxu0 0.0
  %448 = vmatpush.msra.mxu0 0.0
  %449 = vmatpush.msra.mxu0 0.0
  %450 = vmatpush.msra.mxu0 0.0
  %451 = vmatpush.msra.mxu0 0.0
  %452 = vmatpush.msra.mxu0 %v54
  %453 = vmatmul.f32.gmra.mxu0 %v435
  %v454 = vpop.f32.mrf.mxu0
  %v455 = vadd.f32 0.0, %v454
  %456 = vdwg.mxu0
  %v458 = vsel %vm157, %v383, 0
  %460 = vmatpush.msra.mxu0 0.0
  %461 = vmatpush.msra.mxu0 0.0
  %462 = vmatpush.msra.mxu0 0.0
  %463 = vmatpush.msra.mxu0 0.0
  %464 = vmatpush.msra.mxu0 0.0
  %465 = vmatpush.msra.mxu0 0.0
  %466 = vmatpush.msra.mxu0 0.0
  %467 = vmatpush.msra.mxu0 0.0
  %468 = vmatpush.msra.mxu0 0.0
  %469 = vmatpush.msra.mxu0 0.0
  %470 = vmatpush.msra.mxu0 0.0
  %471 = vmatpush.msra.mxu0 0.0
  %472 = vmatpush.msra.mxu0 0.0
  %473 = vmatpush.msra.mxu0 0.0
  %474 = vmatpush.msra.mxu0 0.0
  %475 = vmatpush.msra.mxu0 %v55
  %476 = vmatmul.f32.gmra.mxu0 %v458
  %v477 = vpop.f32.mrf.mxu0
  %v478 = vadd.f32 0.0, %v477
  %479 = vdwg.mxu0
  %v481 = vsel %vm157, %v409, 0
  %483 = vmatpush.msra.mxu0 0.0
  %484 = vmatpush.msra.mxu0 0.0
  %485 = vmatpush.msra.mxu0 0.0
  %486 = vmatpush.msra.mxu0 0.0
  %487 = vmatpush.msra.mxu0 0.0
  %488 = vmatpush.msra.mxu0 0.0
  %489 = vmatpush.msra.mxu0 0.0
  %490 = vmatpush.msra.mxu0 0.0
  %491 = vmatpush.msra.mxu0 0.0
  %492 = vmatpush.msra.mxu0 0.0
  %493 = vmatpush.msra.mxu0 0.0
  %494 = vmatpush.msra.mxu0 0.0
  %495 = vmatpush.msra.mxu0 0.0
  %496 = vmatpush.msra.mxu0 0.0
  %497 = vmatpush.msra.mxu0 0.0
  %498 = vmatpush.msra.mxu0 %v56
  %499 = vmatmul.f32.gmra.mxu0 %v481
  %v500 = vpop.f32.mrf.mxu0
  %v501 = vadd.f32 0.0, %v500
  %502 = vdwg.mxu0
  %v503 = vsel %vm70, %v432, 0.0
  %v504 = vsel %vm70, %v455, 0.0
  %v505 = vadd.f32 %v503, %v504
  %v506 = vsel %vm70, %v478, 0.0
  %v507 = vadd.f32 %v505, %v506
  %v508 = vsel %vm70, %v501, 0.0
  %v509 = vadd.f32 %v507, %v508
  %v511 = vperm.slane %v57, 0
  %v513 = vadd.f32 %v509, %v511
  %514 = vrot.lane.b32.xlu0 %v32, 96
  %v515 = vpop.permute.xlu0 %514
  %v516 = vsel %vm70, %v515, 0
  %518 = vmatpush.msra.mxu0 0.0
  %519 = vmatpush.msra.mxu0 0.0
  %520 = vmatpush.msra.mxu0 0.0
  %521 = vmatpush.msra.mxu0 0.0
  %522 = vmatpush.msra.mxu0 0.0
  %523 = vmatpush.msra.mxu0 0.0
  %524 = vmatpush.msra.mxu0 0.0
  %525 = vmatpush.msra.mxu0 0.0
  %526 = vmatpush.msra.mxu0 0.0
  %527 = vmatpush.msra.mxu0 0.0
  %528 = vmatpush.msra.mxu0 0.0
  %529 = vmatpush.msra.mxu0 0.0
  %530 = vmatpush.msra.mxu0 %v36
  %531 = vmatpush.msra.mxu0 %v35
  %532 = vmatpush.msra.mxu0 %v34
  %533 = vmatpush.msra.mxu0 %v33
  %534 = vmatmul.f32.gmra.mxu0 %v516
  %v535 = vpop.f32.mrf.mxu0
  %v536 = vadd.f32 %v62, %v535
  %537 = vdwg.mxu0
  %538 = vmatpush.msra.mxu0 0.0
  %539 = vmatpush.msra.mxu0 0.0
  %540 = vmatpush.msra.mxu0 0.0
  %541 = vmatpush.msra.mxu0 0.0
  %542 = vmatpush.msra.mxu0 0.0
  %543 = vmatpush.msra.mxu0 0.0
  %544 = vmatpush.msra.mxu0 0.0
  %545 = vmatpush.msra.mxu0 0.0
  %546 = vmatpush.msra.mxu0 0.0
  %547 = vmatpush.msra.mxu0 0.0
  %548 = vmatpush.msra.mxu0 0.0
  %549 = vmatpush.msra.mxu0 0.0
  %550 = vmatpush.msra.mxu0 %v40
  %551 = vmatpush.msra.mxu0 %v39
  %552 = vmatpush.msra.mxu0 %v38
  %553 = vmatpush.msra.mxu0 %v37
  %554 = vmatmul.f32.gmra.mxu0 %v516
  %v555 = vpop.f32.mrf.mxu0
  %v556 = vadd.f32 %v63, %v555
  %557 = vdwg.mxu0
  %558 = vmatpush.msra.mxu0 0.0
  %559 = vmatpush.msra.mxu0 0.0
  %560 = vmatpush.msra.mxu0 0.0
  %561 = vmatpush.msra.mxu0 0.0
  %562 = vmatpush.msra.mxu0 0.0
  %563 = vmatpush.msra.mxu0 0.0
  %564 = vmatpush.msra.mxu0 0.0
  %565 = vmatpush.msra.mxu0 0.0
  %566 = vmatpush.msra.mxu0 0.0
  %567 = vmatpush.msra.mxu0 0.0
  %568 = vmatpush.msra.mxu0 0.0
  %569 = vmatpush.msra.mxu0 0.0
  %570 = vmatpush.msra.mxu0 %v44
  %571 = vmatpush.msra.mxu0 %v43
  %572 = vmatpush.msra.mxu0 %v42
  %573 = vmatpush.msra.mxu0 %v41
  %574 = vmatmul.f32.gmra.mxu0 %v516
  %v575 = vpop.f32.mrf.mxu0
  %v576 = vadd.f32 %v64, %v575
  %577 = vdwg.mxu0
  %578 = vmatpush.msra.mxu0 0.0
  %579 = vmatpush.msra.mxu0 0.0
  %580 = vmatpush.msra.mxu0 0.0
  %581 = vmatpush.msra.mxu0 0.0
  %582 = vmatpush.msra.mxu0 0.0
  %583 = vmatpush.msra.mxu0 0.0
  %584 = vmatpush.msra.mxu0 0.0
  %585 = vmatpush.msra.mxu0 0.0
  %586 = vmatpush.msra.mxu0 0.0
  %587 = vmatpush.msra.mxu0 0.0
  %588 = vmatpush.msra.mxu0 0.0
  %589 = vmatpush.msra.mxu0 0.0
  %590 = vmatpush.msra.mxu0 %v48
  %591 = vmatpush.msra.mxu0 %v47
  %592 = vmatpush.msra.mxu0 %v46
  %593 = vmatpush.msra.mxu0 %v45
  %594 = vmatmul.f32.gmra.mxu0 %v516
  %v595 = vpop.f32.mrf.mxu0
  %v596 = vadd.f32 %v65, %v595
  %597 = vdwg.mxu0
  %599 = vrot.lane.b32.xlu0 %v536, 120
  %v600 = vpop.permute.xlu0 %599
  %v601 = vsel %vm157, %v536, 0
  %v603 = vsel %vm157, %v600, 0
  %605 = vmatpush.xpose.msra.mxu0 0.0
  %606 = vmatpush.xpose.msra.mxu0 0.0
  %607 = vmatpush.xpose.msra.mxu0 0.0
  %608 = vmatpush.xpose.msra.mxu0 0.0
  %609 = vmatpush.xpose.msra.mxu0 0.0
  %610 = vmatpush.xpose.msra.mxu0 0.0
  %611 = vmatpush.xpose.msra.mxu0 0.0
  %612 = vmatpush.xpose.msra.mxu0 0.0
  %613 = vmatpush.xpose.msra.mxu0 0.0
  %614 = vmatpush.xpose.msra.mxu0 0.0
  %615 = vmatpush.xpose.msra.mxu0 0.0
  %616 = vmatpush.xpose.msra.mxu0 0.0
  %617 = vmatpush.xpose.msra.mxu0 0.0
  %618 = vmatpush.xpose.msra.mxu0 0.0
  %619 = vmatpush.xpose.msra.mxu0 0.0
  %620 = vmatpush.xpose.msra.mxu0 %v603
  %621 = vmatmul.f32.gmra.mxu0 %v601
  %v622 = vpop.f32.mrf.mxu0
  %v623 = vadd.f32 0.0, %v622
  %624 = vdwg.mxu0
  %626 = vrot.lane.b32.xlu0 %v556, 120
  %v627 = vpop.permute.xlu0 %626
  %v628 = vsel %vm157, %v556, 0
  %v630 = vsel %vm157, %v627, 0
  %632 = vmatpush.xpose.msra.mxu0 0.0
  %633 = vmatpush.xpose.msra.mxu0 0.0
  %634 = vmatpush.xpose.msra.mxu0 0.0
  %635 = vmatpush.xpose.msra.mxu0 0.0
  %636 = vmatpush.xpose.msra.mxu0 0.0
  %637 = vmatpush.xpose.msra.mxu0 0.0
  %638 = vmatpush.xpose.msra.mxu0 0.0
  %639 = vmatpush.xpose.msra.mxu0 0.0
  %640 = vmatpush.xpose.msra.mxu0 0.0
  %641 = vmatpush.xpose.msra.mxu0 0.0
  %642 = vmatpush.xpose.msra.mxu0 0.0
  %643 = vmatpush.xpose.msra.mxu0 0.0
  %644 = vmatpush.xpose.msra.mxu0 0.0
  %645 = vmatpush.xpose.msra.mxu0 0.0
  %646 = vmatpush.xpose.msra.mxu0 0.0
  %647 = vmatpush.xpose.msra.mxu0 %v630
  %648 = vmatmul.f32.gmra.mxu0 %v628
  %v649 = vpop.f32.mrf.mxu0
  %v650 = vadd.f32 0.0, %v649
  %651 = vdwg.mxu0
  %653 = vrot.lane.b32.xlu0 %v576, 120
  %v654 = vpop.permute.xlu0 %653
  %v655 = vsel %vm157, %v576, 0
  %v657 = vsel %vm157, %v654, 0
  %659 = vmatpush.xpose.msra.mxu0 0.0
  %660 = vmatpush.xpose.msra.mxu0 0.0
  %661 = vmatpush.xpose.msra.mxu0 0.0
  %662 = vmatpush.xpose.msra.mxu0 0.0
  %663 = vmatpush.xpose.msra.mxu0 0.0
  %664 = vmatpush.xpose.msra.mxu0 0.0
  %665 = vmatpush.xpose.msra.mxu0 0.0
  %666 = vmatpush.xpose.msra.mxu0 0.0
  %667 = vmatpush.xpose.msra.mxu0 0.0
  %668 = vmatpush.xpose.msra.mxu0 0.0
  %669 = vmatpush.xpose.msra.mxu0 0.0
  %670 = vmatpush.xpose.msra.mxu0 0.0
  %671 = vmatpush.xpose.msra.mxu0 0.0
  %672 = vmatpush.xpose.msra.mxu0 0.0
  %673 = vmatpush.xpose.msra.mxu0 0.0
  %674 = vmatpush.xpose.msra.mxu0 %v657
  %675 = vmatmul.f32.gmra.mxu0 %v655
  %v676 = vpop.f32.mrf.mxu0
  %v677 = vadd.f32 0.0, %v676
  %678 = vdwg.mxu0
  %680 = vrot.lane.b32.xlu0 %v596, 120
  %v681 = vpop.permute.xlu0 %680
  %v682 = vsel %vm157, %v596, 0
  %v684 = vsel %vm157, %v681, 0
  %686 = vmatpush.xpose.msra.mxu0 0.0
  %687 = vmatpush.xpose.msra.mxu0 0.0
  %688 = vmatpush.xpose.msra.mxu0 0.0
  %689 = vmatpush.xpose.msra.mxu0 0.0
  %690 = vmatpush.xpose.msra.mxu0 0.0
  %691 = vmatpush.xpose.msra.mxu0 0.0
  %692 = vmatpush.xpose.msra.mxu0 0.0
  %693 = vmatpush.xpose.msra.mxu0 0.0
  %694 = vmatpush.xpose.msra.mxu0 0.0
  %695 = vmatpush.xpose.msra.mxu0 0.0
  %696 = vmatpush.xpose.msra.mxu0 0.0
  %697 = vmatpush.xpose.msra.mxu0 0.0
  %698 = vmatpush.xpose.msra.mxu0 0.0
  %699 = vmatpush.xpose.msra.mxu0 0.0
  %700 = vmatpush.xpose.msra.mxu0 0.0
  %701 = vmatpush.xpose.msra.mxu0 %v684
  %702 = vmatmul.f32.gmra.mxu0 %v682
  %v703 = vpop.f32.mrf.mxu0
  %v704 = vadd.f32 0.0, %v703
  %705 = vdwg.mxu0
  %v706 = vsel %vm157, %v623, -inf
  %707 = vmax.xlane.f32.xlu0 %v706
  %v708 = vpop.xlane.xlu0 %707
  %v709 = vsel %vm157, %v650, -inf
  %710 = vmax.xlane.f32.xlu0 %v709
  %v711 = vpop.xlane.xlu0 %710
  %v712 = vsel %vm157, %v677, -inf
  %713 = vmax.xlane.f32.xlu0 %v712
  %v714 = vpop.xlane.xlu0 %713
  %v715 = vsel %vm157, %v704, -inf
  %716 = vmax.xlane.f32.xlu0 %v715
  %v717 = vpop.xlane.xlu0 %716
  %v718 = vsub.f32 %v623, %v708
  %v719 = vsub.f32 %v650, %v711
  %v720 = vsub.f32 %v677, %v714
  %v721 = vsub.f32 %v704, %v717
  %v722 = vmul.f32 %v718, 1.442695
  %v723 = vpow.pop %v722
  %v724 = vmul.f32 %v719, 1.442695
  %v725 = vpow.pop %v724
  %v726 = vmul.f32 %v720, 1.442695
  %v727 = vpow.pop %v726
  %v728 = vmul.f32 %v721, 1.442695
  %v729 = vpow.pop %v728
  %v730 = vsel %vm157, %v723, 0.0
  %731 = vadd.xlane.f32.xlu0 %v730
  %v732 = vpop.xlane.xlu0 %731
  %v733 = vsel %vm157, %v725, 0.0
  %734 = vadd.xlane.f32.xlu0 %v733
  %v735 = vpop.xlane.xlu0 %734
  %v736 = vsel %vm157, %v727, 0.0
  %737 = vadd.xlane.f32.xlu0 %v736
  %v738 = vpop.xlane.xlu0 %737
  %v739 = vsel %vm157, %v729, 0.0
  %740 = vadd.xlane.f32.xlu0 %v739
  %v741 = vpop.xlane.xlu0 %740
  %v742 = vrcp.pop %v732
  %v743 = vrcp.pop %v735
  %v744 = vrcp.pop %v738
  %v745 = vrcp.pop %v741
  %v746 = vmul.f32 %v723, %v742
  %v747 = vmul.f32 %v725, %v743
  %v748 = vmul.f32 %v727, %v744
  %v749 = vmul.f32 %v729, %v745
  %750 = vrot.lane.b32.xlu0 %v536, 112
  %v751 = vpop.permute.xlu0 %750
  %v754 = vsel %vm157, %v746, 0
  %756 = vmatpush.msra.mxu0 0.0
  %757 = vmatpush.msra.mxu0 0.0
  %758 = vmatpush.msra.mxu0 0.0
  %759 = vmatpush.msra.mxu0 0.0
  %760 = vmatpush.msra.mxu0 0.0
  %761 = vmatpush.msra.mxu0 0.0
  %762 = vmatpush.msra.mxu0 0.0
  %763 = vmatpush.msra.mxu0 0.0
  %764 = vmatpush.msra.mxu0 0.0
  %765 = vmatpush.msra.mxu0 0.0
  %766 = vmatpush.msra.mxu0 0.0
  %767 = vmatpush.msra.mxu0 0.0
  %768 = vmatpush.msra.mxu0 0.0
  %769 = vmatpush.msra.mxu0 0.0
  %770 = vmatpush.msra.mxu0 0.0
  %771 = vmatpush.msra.mxu0 %v751
  %772 = vmatmul.f32.gmra.mxu0 %v754
  %v773 = vpop.f32.mrf.mxu0
  %v774 = vadd.f32 0.0, %v773
  %775 = vdwg.mxu0
  %776 = vrot.lane.b32.xlu0 %v556, 112
  %v777 = vpop.permute.xlu0 %776
  %v780 = vsel %vm157, %v747, 0
  %782 = vmatpush.msra.mxu0 0.0
  %783 = vmatpush.msra.mxu0 0.0
  %784 = vmatpush.msra.mxu0 0.0
  %785 = vmatpush.msra.mxu0 0.0
  %786 = vmatpush.msra.mxu0 0.0
  %787 = vmatpush.msra.mxu0 0.0
  %788 = vmatpush.msra.mxu0 0.0
  %789 = vmatpush.msra.mxu0 0.0
  %790 = vmatpush.msra.mxu0 0.0
  %791 = vmatpush.msra.mxu0 0.0
  %792 = vmatpush.msra.mxu0 0.0
  %793 = vmatpush.msra.mxu0 0.0
  %794 = vmatpush.msra.mxu0 0.0
  %795 = vmatpush.msra.mxu0 0.0
  %796 = vmatpush.msra.mxu0 0.0
  %797 = vmatpush.msra.mxu0 %v777
  %798 = vmatmul.f32.gmra.mxu0 %v780
  %v799 = vpop.f32.mrf.mxu0
  %v800 = vadd.f32 0.0, %v799
  %801 = vdwg.mxu0
  %802 = vrot.lane.b32.xlu0 %v576, 112
  %v803 = vpop.permute.xlu0 %802
  %v806 = vsel %vm157, %v748, 0
  %808 = vmatpush.msra.mxu0 0.0
  %809 = vmatpush.msra.mxu0 0.0
  %810 = vmatpush.msra.mxu0 0.0
  %811 = vmatpush.msra.mxu0 0.0
  %812 = vmatpush.msra.mxu0 0.0
  %813 = vmatpush.msra.mxu0 0.0
  %814 = vmatpush.msra.mxu0 0.0
  %815 = vmatpush.msra.mxu0 0.0
  %816 = vmatpush.msra.mxu0 0.0
  %817 = vmatpush.msra.mxu0 0.0
  %818 = vmatpush.msra.mxu0 0.0
  %819 = vmatpush.msra.mxu0 0.0
  %820 = vmatpush.msra.mxu0 0.0
  %821 = vmatpush.msra.mxu0 0.0
  %822 = vmatpush.msra.mxu0 0.0
  %823 = vmatpush.msra.mxu0 %v803
  %824 = vmatmul.f32.gmra.mxu0 %v806
  %v825 = vpop.f32.mrf.mxu0
  %v826 = vadd.f32 0.0, %v825
  %827 = vdwg.mxu0
  %828 = vrot.lane.b32.xlu0 %v596, 112
  %v829 = vpop.permute.xlu0 %828
  %v832 = vsel %vm157, %v749, 0
  %834 = vmatpush.msra.mxu0 0.0
  %835 = vmatpush.msra.mxu0 0.0
  %836 = vmatpush.msra.mxu0 0.0
  %837 = vmatpush.msra.mxu0 0.0
  %838 = vmatpush.msra.mxu0 0.0
  %839 = vmatpush.msra.mxu0 0.0
  %840 = vmatpush.msra.mxu0 0.0
  %841 = vmatpush.msra.mxu0 0.0
  %842 = vmatpush.msra.mxu0 0.0
  %843 = vmatpush.msra.mxu0 0.0
  %844 = vmatpush.msra.mxu0 0.0
  %845 = vmatpush.msra.mxu0 0.0
  %846 = vmatpush.msra.mxu0 0.0
  %847 = vmatpush.msra.mxu0 0.0
  %848 = vmatpush.msra.mxu0 0.0
  %849 = vmatpush.msra.mxu0 %v829
  %850 = vmatmul.f32.gmra.mxu0 %v832
  %v851 = vpop.f32.mrf.mxu0
  %v852 = vadd.f32 0.0, %v851
  %853 = vdwg.mxu0
  %v855 = vsel %vm157, %v774, 0
  %857 = vmatpush.msra.mxu0 0.0
  %858 = vmatpush.msra.mxu0 0.0
  %859 = vmatpush.msra.mxu0 0.0
  %860 = vmatpush.msra.mxu0 0.0
  %861 = vmatpush.msra.mxu0 0.0
  %862 = vmatpush.msra.mxu0 0.0
  %863 = vmatpush.msra.mxu0 0.0
  %864 = vmatpush.msra.mxu0 0.0
  %865 = vmatpush.msra.mxu0 0.0
  %866 = vmatpush.msra.mxu0 0.0
  %867 = vmatpush.msra.mxu0 0.0
  %868 = vmatpush.msra.mxu0 0.0
  %869 = vmatpush.msra.mxu0 0.0
  %870 = vmatpush.msra.mxu0 0.0
  %871 = vmatpush.msra.mxu0 0.0
  %872 = vmatpush.msra.mxu0 %v53
  %873 = vmatmul.f32.gmra.mxu0 %v855
  %v874 = vpop.f32.mrf.mxu0
  %v875 = vadd.f32 0.0, %v874
  %876 = vdwg.mxu0
  %v878 = vsel %vm157, %v800, 0
  %880 = vmatpush.msra.mxu0 0.0
  %881 = vmatpush.msra.mxu0 0.0
  %882 = vmatpush.msra.mxu0 0.0
  %883 = vmatpush.msra.mxu0 0.0
  %884 = vmatpush.msra.mxu0 0.0
  %885 = vmatpush.msra.mxu0 0.0
  %886 = vmatpush.msra.mxu0 0.0
  %887 = vmatpush.msra.mxu0 0.0
  %888 = vmatpush.msra.mxu0 0.0
  %889 = vmatpush.msra.mxu0 0.0
  %890 = vmatpush.msra.mxu0 0.0
  %891 = vmatpush.msra.mxu0 0.0
  %892 = vmatpush.msra.mxu0 0.0
  %893 = vmatpush.msra.mxu0 0.0
  %894 = vmatpush.msra.mxu0 0.0
  %895 = vmatpush.msra.mxu0 %v54
  %896 = vmatmul.f32.gmra.mxu0 %v878
  %v897 = vpop.f32.mrf.mxu0
  %v898 = vadd.f32 0.0, %v897
  %899 = vdwg.mxu0
  %v901 = vsel %vm157, %v826, 0
  %903 = vmatpush.msra.mxu0 0.0
  %904 = vmatpush.msra.mxu0 0.0
  %905 = vmatpush.msra.mxu0 0.0
  %906 = vmatpush.msra.mxu0 0.0
  %907 = vmatpush.msra.mxu0 0.0
  %908 = vmatpush.msra.mxu0 0.0
  %909 = vmatpush.msra.mxu0 0.0
  %910 = vmatpush.msra.mxu0 0.0
  %911 = vmatpush.msra.mxu0 0.0
  %912 = vmatpush.msra.mxu0 0.0
  %913 = vmatpush.msra.mxu0 0.0
  %914 = vmatpush.msra.mxu0 0.0
  %915 = vmatpush.msra.mxu0 0.0
  %916 = vmatpush.msra.mxu0 0.0
  %917 = vmatpush.msra.mxu0 0.0
  %918 = vmatpush.msra.mxu0 %v55
  %919 = vmatmul.f32.gmra.mxu0 %v901
  %v920 = vpop.f32.mrf.mxu0
  %v921 = vadd.f32 0.0, %v920
  %922 = vdwg.mxu0
  %v924 = vsel %vm157, %v852, 0
  %926 = vmatpush.msra.mxu0 0.0
  %927 = vmatpush.msra.mxu0 0.0
  %928 = vmatpush.msra.mxu0 0.0
  %929 = vmatpush.msra.mxu0 0.0
  %930 = vmatpush.msra.mxu0 0.0
  %931 = vmatpush.msra.mxu0 0.0
  %932 = vmatpush.msra.mxu0 0.0
  %933 = vmatpush.msra.mxu0 0.0
  %934 = vmatpush.msra.mxu0 0.0
  %935 = vmatpush.msra.mxu0 0.0
  %936 = vmatpush.msra.mxu0 0.0
  %937 = vmatpush.msra.mxu0 0.0
  %938 = vmatpush.msra.mxu0 0.0
  %939 = vmatpush.msra.mxu0 0.0
  %940 = vmatpush.msra.mxu0 0.0
  %941 = vmatpush.msra.mxu0 %v56
  %942 = vmatmul.f32.gmra.mxu0 %v924
  %v943 = vpop.f32.mrf.mxu0
  %v944 = vadd.f32 0.0, %v943
  %945 = vdwg.mxu0
  %v946 = vsel %vm70, %v875, 0.0
  %v947 = vsel %vm70, %v898, 0.0
  %v948 = vadd.f32 %v946, %v947
  %v949 = vsel %vm70, %v921, 0.0
  %v950 = vadd.f32 %v948, %v949
  %v951 = vsel %vm70, %v944, 0.0
  %v952 = vadd.f32 %v950, %v951
  %v953 = vadd.f32 %v952, %v511
  %v954 = vld [vmem:[%s5] sm:$0xff]
  %v955 = vld [vmem:[%s5 + $0x8] sm:$0xff]
  %v956 = vld [vmem:[%s5 + $0x10] sm:$0xff]
  %v957 = vld [vmem:[%s5 + $0x18] sm:$0xff]
  %v958 = vld [vmem:[%s6] sm:$0x1]
  %v960 = vperm.slane %v958, 0
  %v963 = vsel %vm70, %v513, 0
  %v966 = vsel %vm70, %v953, 0
  %968 = vmatpush.msra.mxu0 0.0
  %969 = vmatpush.msra.mxu0 0.0
  %970 = vmatpush.msra.mxu0 0.0
  %971 = vmatpush.msra.mxu0 0.0
  %972 = vmatpush.msra.mxu0 0.0
  %973 = vmatpush.msra.mxu0 0.0
  %974 = vmatpush.msra.mxu0 0.0
  %975 = vmatpush.msra.mxu0 0.0
  %976 = vmatpush.msra.mxu0 0.0
  %977 = vmatpush.msra.mxu0 0.0
  %978 = vmatpush.msra.mxu0 0.0
  %979 = vmatpush.msra.mxu0 0.0
  %980 = vmatpush.msra.mxu0 %v957
  %981 = vmatpush.msra.mxu0 %v956
  %982 = vmatpush.msra.mxu0 %v955
  %983 = vmatpush.msra.mxu0 %v954
  %984 = vmatmul.f32.gmra.mxu0 %v963
  %v985 = vpop.f32.mrf.mxu0
  %v986 = vadd.f32 %v960, %v985
  %987 = vmatmul.f32.gmra.mxu0 %v966
  %v988 = vpop.f32.mrf.mxu0
  %v989 = vadd.f32 %v960, %v988
  %990 = vdwg.mxu0
  %v991 = vmax.f32 %v986, 0.0
  %v992 = vmax.f32 %v989, 0.0
  %v993 = vld [vmem:[%s7] sm:$0xff]
  %v994 = vld [vmem:[%s7 + $0x8] sm:$0xff]
  %v995 = vld [vmem:[%s7 + $0x10] sm:$0xff]
  %v996 = vld [vmem:[%s7 + $0x18] sm:$0xff]
  %v997 = vld [vmem:[%s7 + $0x20] sm:$0xff]
  %v998 = vld [vmem:[%s7 + $0x28] sm:$0xff]
  %v999 = vld [vmem:[%s7 + $0x30] sm:$0xff]
  %v1000 = vld [vmem:[%s7 + $0x38] sm:$0xff]
  %v1001 = vld [vmem:[%s8] sm:$0x1]
  %v1003 = vperm.slane %v1001, 0
  %vm1005 = vcmask 523264
  %v1007 = vsel %vm1005, %v991, 0
  %v1010 = vsel %vm1005, %v992, 0
  %1012 = vmatpush.msra.mxu0 0.0
  %1013 = vmatpush.msra.mxu0 0.0
  %1014 = vmatpush.msra.mxu0 0.0
  %1015 = vmatpush.msra.mxu0 0.0
  %1016 = vmatpush.msra.mxu0 0.0
  %1017 = vmatpush.msra.mxu0 0.0
  %1018 = vmatpush.msra.mxu0 0.0
  %1019 = vmatpush.msra.mxu0 0.0
  %1020 = vmatpush.msra.mxu0 %v1000
  %1021 = vmatpush.msra.mxu0 %v999
  %1022 = vmatpush.msra.mxu0 %v998
  %1023 = vmatpush.msra.mxu0 %v997
  %1024 = vmatpush.msra.mxu0 %v996
  %1025 = vmatpush.msra.mxu0 %v995
  %1026 = vmatpush.msra.mxu0 %v994
  %1027 = vmatpush.msra.mxu0 %v993
  %1028 = vmatmul.f32.gmra.mxu0 %v1007
  %v1029 = vpop.f32.mrf.mxu0
  %v1030 = vadd.f32 %v1003, %v1029
  %1031 = vmatmul.f32.gmra.mxu0 %v1010
  %v1032 = vpop.f32.mrf.mxu0
  %v1033 = vadd.f32 %v1003, %v1032
  %1034 = vdwg.mxu0
  %1035 = vst.msk [vmem:[%s9] sm:$0xff] %vm70, %v1030
  %1037 = vrot.lane.b32.xlu0 %v1033, 32
  %v1038 = vpop.permute.xlu0 %1037
  %vm1040 = vcmask 523520
  %1041 = vst.msk [vmem:[%s9] sm:$0xff] %vm1040, %v1038
  // Predicated region
  $region38: #{custom_encoder_layer.1} parent=0 // pred_check
    _
  $region39: #{custom_encoder_layer.1} parent=0 // pred_check_branch
    %1043 = sbr.rel (0) target = $region41
  $region40: #{custom_encoder_layer.1} parent=0 // pred_region
    _
  $region41: #{custom_encoder_layer.1} parent=0 // pred_fallthru
    _
  // Predicated region
  $region42: #{custom_encoder_layer.1} parent=0 // pred_check
    _
  $region43: #{custom_encoder_layer.1} parent=0 // pred_check_branch
    %1045 = sbr.rel (0) target = $region45
  $region44: #{custom_encoder_layer.1} parent=0 // pred_region
    _
  $region45: #{custom_encoder_layer.1} parent=0 // pred_fallthru
    _

</llo_original>
